<compile_context>
chip_gen: v5e
topology: v5e:2x2
jax: 0.10.0
libtpu: 0.0.40
codegen_flags: <defaults>
</compile_context>

<pallas_src>
import jax
import jax.numpy as jnp
from jax.experimental import pallas as pl
from jax.experimental.pallas import tpu as pltpu

GRID_SIZE = 5        # KANLinear default
SPLINE_ORDER = 3     # KANLinear default
GRID_RANGE = (-1.0, 1.0)


def _kan_linear_kernel(x_ref, grid_ref, bw_ref, sw_ref, o_ref):
    # x_ref   : (TB, Din)       input tile (lanes = Din)
    # grid_ref: (L, 1, Din)     B-spline knot grid, broadcast-ready over batch
    # bw_ref  : (Din, Dout)     base_weight pre-transposed (no in-kernel .T)
    # sw_ref  : (G, Din, Dout)  spline_weight * spline_scaler, pre-transposed
    # o_ref   : (TB, Dout)      this tile's output rows
    x = x_ref[...].astype(jnp.float32)            # (TB, Din)
    g = grid_ref[...].astype(jnp.float32)         # (L, 1, Din)
    x3 = x[None, :, :]                            # (1, TB, Din)

    L = g.shape[0]
    K = SPLINE_ORDER

    # Order-0 bases: indicator of which knot interval each x lands in.
    bases = jnp.where((x3 >= g[:-1]) & (x3 < g[1:]), 1.0, 0.0)     # (L-1, TB, Din)

    # Cox–de Boor recursion, fully unrolled (K=3). Elementwise VPU work on
    # (n, TB, Din) slabs; Din stays on the lane axis throughout.
    for k in range(1, K + 1):
        n = L - k - 1
        left = (x3 - g[:n]) / (g[k:k + n] - g[:n]) * bases[:n]
        right = ((g[k + 1:k + 1 + n] - x3)
                 / (g[k + 1:k + 1 + n] - g[1:1 + n])) * bases[1:1 + n]
        bases = left + right                                       # (n, TB, Din)
    # bases: (G, TB, Din), G = GRID_SIZE + SPLINE_ORDER

    # Base path: SiLU(x) @ base_weight^T  (already transposed in wrapper).
    silu = x * (1.0 / (1.0 + jnp.exp(-x)))
    acc = jnp.dot(silu, bw_ref[...], preferred_element_type=jnp.float32)

    # Spline path: sum_g bases[g] @ W_spline[g]  — static unroll (G=8), all
    # operands already in MXU-friendly layout, f32 accumulation.
    G = sw_ref.shape[0]
    for gi in range(G):
        acc = acc + jnp.dot(bases[gi], sw_ref[gi],
                            preferred_element_type=jnp.float32)

    # FBM_KANLayer epilogue: (tanh(out) + 1) / 2
    o_ref[...] = ((jnp.tanh(acc) + 1.0) * 0.5).astype(o_ref.dtype)


def fbm_kan_layer_forward(x, grid, base_weight, spline_weight, spline_scaler):
    """x: any shape flattening to (-1, Din); grid: (Din, L);
    base_weight: (Dout, Din); spline_weight: (Dout, Din, G);
    spline_scaler: (Dout, Din)  ->  (B, Dout) in [0, 1]."""
    Dout, Din = base_weight.shape
    G = spline_weight.shape[-1]
    L = grid.shape[-1]

    x_flat = x.reshape(-1, Din)
    B = x_flat.shape[0]

    # Wrapper-side layout plumbing (free): pre-transpose so the kernel does
    # zero XLU transposes, and make the grid broadcast-ready over batch.
    bw_t = jnp.transpose(base_weight)                                        # (Din, Dout)
    sw_t = jnp.transpose(spline_weight * spline_scaler[..., None], (2, 1, 0))  # (G, Din, Dout)
    grid_t = jnp.transpose(grid)[:, None, :]                                 # (L, 1, Din)

    # Batch tiling: small problems -> single fused grid step (all operands fit
    # VMEM on v5e/v6e/v7x); large batches -> 256-row tiles, parallel axis so
    # v7x can split the work across its 2 TensorCores.
    if B <= 512:
        TB = B
        xp = x_flat
    else:
        TB = 256
        pad = (-B) % TB
        xp = jnp.pad(x_flat, ((0, pad), (0, 0)))
    nb = xp.shape[0] // TB

    cost = pl.CostEstimate(
        flops=2 * B * Din * Dout * (1 + G) + 30 * B * Din * G,
        transcendentals=B * (Din + Dout),
        bytes_accessed=4 * (xp.size + grid_t.size + bw_t.size + sw_t.size
                            + xp.shape[0] * Dout),
    )

    out = pl.pallas_call(
        _kan_linear_kernel,
        out_shape=jax.ShapeDtypeStruct((xp.shape[0], Dout), x.dtype),
        grid_spec=pltpu.PrefetchScalarGridSpec(
            num_scalar_prefetch=0,
            grid=(nb,),
            in_specs=[
                pl.BlockSpec((TB, Din), lambda i: (i, 0)),          # x tile
                pl.BlockSpec((L, 1, Din), lambda i: (0, 0, 0)),     # knot grid (shared)
                pl.BlockSpec((Din, Dout), lambda i: (0, 0)),        # base weight (shared)
                pl.BlockSpec((G, Din, Dout), lambda i: (0, 0, 0)),  # spline weight (shared)
            ],
            out_specs=pl.BlockSpec((TB, Dout), lambda i: (i, 0)),
        ),
        compiler_params=pltpu.CompilerParams(
            dimension_semantics=("parallel",)),
        cost_estimate=cost,
    )(xp, grid_t, bw_t, sw_t)

    return out[:B]


def _reference_forward(x, grid, base_weight, spline_weight, spline_scaler):
    # Pure-JAX mirror of efficient-kan KANLinear + FBM_KANLayer epilogue,
    # using the original (torch) layouts.
    Dout, Din = base_weight.shape
    x_flat = x.reshape(-1, Din).astype(jnp.float32)
    K = SPLINE_ORDER
    xg = x_flat[:, :, None]                     # (B, Din, 1)
    g = grid[None, :, :]                        # (1, Din, L)
    bases = ((xg >= g[:, :, :-1]) & (xg < g[:, :, 1:])).astype(jnp.float32)
    for k in range(1, K + 1):
        bases = ((xg - g[:, :, :-(k + 1)])
                 / (g[:, :, k:-1] - g[:, :, :-(k + 1)]) * bases[:, :, :-1]
                 + (g[:, :, k + 1:] - xg)
                 / (g[:, :, k + 1:] - g[:, :, 1:-k]) * bases[:, :, 1:])
    scaled = spline_weight * spline_scaler[..., None]          # (Dout, Din, G)
    base_out = (x_flat * (1.0 / (1.0 + jnp.exp(-x_flat)))) @ base_weight.T
    spline_out = bases.reshape(x_flat.shape[0], -1) @ scaled.reshape(Dout, -1).T
    out = base_out + spline_out
    return (jnp.tanh(out) + 1.0) / 2.0


if __name__ == "__main__":
    key = jax.random.PRNGKey(0)

    batch, spatial = 8, 8            # x: [8, 8, 8] -> view(-1, 64)
    input_size = spatial * spatial   # 64
    num_classes = 10
    G = GRID_SIZE + SPLINE_ORDER                  # 8 spline bases per feature
    L = GRID_SIZE + 2 * SPLINE_ORDER + 1          # 12 knots per feature

    k_x, k_bw, k_sw, k_ss = jax.random.split(key, 4)
    x = jax.random.normal(k_x, (batch, spatial, spatial), dtype=jnp.float32)

    # Deterministic synthetic KANLinear parameters (torch layouts).
    base_weight = jax.random.normal(k_bw, (num_classes, input_size),
                                    dtype=jnp.float32) * (1.0 / jnp.sqrt(input_size))
    spline_weight = jax.random.normal(k_sw, (num_classes, input_size, G),
                                      dtype=jnp.float32) * 0.1
    spline_scaler = 1.0 + 0.1 * jax.random.normal(k_ss, (num_classes, input_size),
                                                  dtype=jnp.float32)

    # Uniform knot grid extended by spline_order on each side (KANLinear.__init__).
    h = (GRID_RANGE[1] - GRID_RANGE[0]) / GRID_SIZE
    knots = (jnp.arange(-SPLINE_ORDER, GRID_SIZE + SPLINE_ORDER + 1,
                        dtype=jnp.float32) * h + GRID_RANGE[0])
    grid = jnp.tile(knots[None, :], (input_size, 1))            # (Din, L)

    out = fbm_kan_layer_forward(x, grid, base_weight, spline_weight, spline_scaler)
    out = jax.block_until_ready(out)

    ref = _reference_forward(x, grid, base_weight, spline_weight, spline_scaler)
    assert out.shape == (batch, num_classes), out.shape
    assert jnp.allclose(out, ref, atol=1e-5, rtol=1e-5), "mismatch vs reference"

    print("KERNEL_OK")
</pallas_src>

<mosaic_0001>
module attributes {stable_mosaic.version = 11 : i64} {
  func.func @_kan_linear_kernel(%arg0: i32, %arg1: memref<8x64xf32, #tpu.memory_space<vmem>>, %arg2: memref<12x1x64xf32, #tpu.memory_space<vmem>>, %arg3: memref<64x10xf32, #tpu.memory_space<vmem>>, %arg4: memref<8x64x10xf32, #tpu.memory_space<vmem>>, %arg5: memref<8x10xf32, #tpu.memory_space<vmem>>) attributes {dimension_semantics = [#tpu.dimension_semantics<parallel>], iteration_bounds = array<i64: 1>, scalar_prefetch = 0 : i64, scratch_operands = 0 : i64, tpu.core_type = #tpu.core_type<tc>, window_params = [{transform_indices = @transform_0, window_bounds = array<i64: 8, 64>}, {pipeline_mode = #tpu.pipeline_mode<synchronous>, transform_indices = @transform_1, window_bounds = array<i64: 12, 1, 64>}, {pipeline_mode = #tpu.pipeline_mode<synchronous>, transform_indices = @transform_2, window_bounds = array<i64: 64, 10>}, {pipeline_mode = #tpu.pipeline_mode<synchronous>, transform_indices = @transform_3, window_bounds = array<i64: 8, 64, 10>}, {transform_indices = @transform_4, window_bounds = array<i64: 8, 10>}]} {
    %c0 = arith.constant 0 : index
    %c0_0 = arith.constant 0 : index
    %0 = vector.load %arg1[%c0, %c0_0] : memref<8x64xf32, #tpu.memory_space<vmem>>, vector<8x64xf32>
    %c0_1 = arith.constant 0 : index
    %c0_2 = arith.constant 0 : index
    %c0_3 = arith.constant 0 : index
    %1 = vector.load %arg2[%c0_1, %c0_2, %c0_3] : memref<12x1x64xf32, #tpu.memory_space<vmem>>, vector<12x1x64xf32>
    %2 = vector.shape_cast %0 : vector<8x64xf32> to vector<1x8x64xf32>
    %3 = vector.extract_strided_slice %1 {offsets = [0, 0, 0], sizes = [11, 1, 64], strides = [1, 1, 1]} : vector<12x1x64xf32> to vector<11x1x64xf32>
    %4 = vector.broadcast %2 : vector<1x8x64xf32> to vector<11x8x64xf32>
    %5 = vector.broadcast %3 : vector<11x1x64xf32> to vector<11x8x64xf32>
    %6 = arith.cmpf oge, %4, %5 : vector<11x8x64xf32>
    %7 = vector.extract_strided_slice %1 {offsets = [1, 0, 0], sizes = [11, 1, 64], strides = [1, 1, 1]} : vector<12x1x64xf32> to vector<11x1x64xf32>
    %8 = vector.broadcast %2 : vector<1x8x64xf32> to vector<11x8x64xf32>
    %9 = vector.broadcast %7 : vector<11x1x64xf32> to vector<11x8x64xf32>
    %10 = arith.cmpf olt, %8, %9 : vector<11x8x64xf32>
    %11 = arith.andi %6, %10 : vector<11x8x64xi1>
    %cst = arith.constant 1.000000e+00 : f32
    %cst_4 = arith.constant 0.000000e+00 : f32
    %12 = vector.broadcast %cst : f32 to vector<11x8x64xf32>
    %13 = vector.broadcast %cst_4 : f32 to vector<11x8x64xf32>
    %14 = arith.select %11, %12, %13 : vector<11x8x64xi1>, vector<11x8x64xf32>
    %15 = vector.extract_strided_slice %1 {offsets = [0, 0, 0], sizes = [10, 1, 64], strides = [1, 1, 1]} : vector<12x1x64xf32> to vector<10x1x64xf32>
    %16 = vector.broadcast %2 : vector<1x8x64xf32> to vector<10x8x64xf32>
    %17 = vector.broadcast %15 : vector<10x1x64xf32> to vector<10x8x64xf32>
    %18 = arith.subf %16, %17 : vector<10x8x64xf32>
    %19 = vector.extract_strided_slice %1 {offsets = [1, 0, 0], sizes = [10, 1, 64], strides = [1, 1, 1]} : vector<12x1x64xf32> to vector<10x1x64xf32>
    %20 = vector.extract_strided_slice %1 {offsets = [0, 0, 0], sizes = [10, 1, 64], strides = [1, 1, 1]} : vector<12x1x64xf32> to vector<10x1x64xf32>
    %21 = arith.subf %19, %20 : vector<10x1x64xf32>
    %22 = vector.broadcast %21 : vector<10x1x64xf32> to vector<10x8x64xf32>
    %23 = arith.divf %18, %22 : vector<10x8x64xf32>
    %24 = vector.extract_strided_slice %14 {offsets = [0, 0, 0], sizes = [10, 8, 64], strides = [1, 1, 1]} : vector<11x8x64xf32> to vector<10x8x64xf32>
    %25 = arith.mulf %23, %24 : vector<10x8x64xf32>
    %26 = vector.extract_strided_slice %1 {offsets = [2, 0, 0], sizes = [10, 1, 64], strides = [1, 1, 1]} : vector<12x1x64xf32> to vector<10x1x64xf32>
    %27 = vector.broadcast %26 : vector<10x1x64xf32> to vector<10x8x64xf32>
    %28 = vector.broadcast %2 : vector<1x8x64xf32> to vector<10x8x64xf32>
    %29 = arith.subf %27, %28 : vector<10x8x64xf32>
    %30 = vector.extract_strided_slice %1 {offsets = [2, 0, 0], sizes = [10, 1, 64], strides = [1, 1, 1]} : vector<12x1x64xf32> to vector<10x1x64xf32>
    %31 = vector.extract_strided_slice %1 {offsets = [1, 0, 0], sizes = [10, 1, 64], strides = [1, 1, 1]} : vector<12x1x64xf32> to vector<10x1x64xf32>
    %32 = arith.subf %30, %31 : vector<10x1x64xf32>
    %33 = vector.broadcast %32 : vector<10x1x64xf32> to vector<10x8x64xf32>
    %34 = arith.divf %29, %33 : vector<10x8x64xf32>
    %35 = vector.extract_strided_slice %14 {offsets = [1, 0, 0], sizes = [10, 8, 64], strides = [1, 1, 1]} : vector<11x8x64xf32> to vector<10x8x64xf32>
    %36 = arith.mulf %34, %35 : vector<10x8x64xf32>
    %37 = arith.addf %25, %36 : vector<10x8x64xf32>
    %38 = vector.extract_strided_slice %1 {offsets = [0, 0, 0], sizes = [9, 1, 64], strides = [1, 1, 1]} : vector<12x1x64xf32> to vector<9x1x64xf32>
    %39 = vector.broadcast %2 : vector<1x8x64xf32> to vector<9x8x64xf32>
    %40 = vector.broadcast %38 : vector<9x1x64xf32> to vector<9x8x64xf32>
    %41 = arith.subf %39, %40 : vector<9x8x64xf32>
    %42 = vector.extract_strided_slice %1 {offsets = [2, 0, 0], sizes = [9, 1, 64], strides = [1, 1, 1]} : vector<12x1x64xf32> to vector<9x1x64xf32>
    %43 = vector.extract_strided_slice %1 {offsets = [0, 0, 0], sizes = [9, 1, 64], strides = [1, 1, 1]} : vector<12x1x64xf32> to vector<9x1x64xf32>
    %44 = arith.subf %42, %43 : vector<9x1x64xf32>
    %45 = vector.broadcast %44 : vector<9x1x64xf32> to vector<9x8x64xf32>
    %46 = arith.divf %41, %45 : vector<9x8x64xf32>
    %47 = vector.extract_strided_slice %37 {offsets = [0, 0, 0], sizes = [9, 8, 64], strides = [1, 1, 1]} : vector<10x8x64xf32> to vector<9x8x64xf32>
    %48 = arith.mulf %46, %47 : vector<9x8x64xf32>
    %49 = vector.extract_strided_slice %1 {offsets = [3, 0, 0], sizes = [9, 1, 64], strides = [1, 1, 1]} : vector<12x1x64xf32> to vector<9x1x64xf32>
    %50 = vector.broadcast %49 : vector<9x1x64xf32> to vector<9x8x64xf32>
    %51 = vector.broadcast %2 : vector<1x8x64xf32> to vector<9x8x64xf32>
    %52 = arith.subf %50, %51 : vector<9x8x64xf32>
    %53 = vector.extract_strided_slice %1 {offsets = [3, 0, 0], sizes = [9, 1, 64], strides = [1, 1, 1]} : vector<12x1x64xf32> to vector<9x1x64xf32>
    %54 = vector.extract_strided_slice %1 {offsets = [1, 0, 0], sizes = [9, 1, 64], strides = [1, 1, 1]} : vector<12x1x64xf32> to vector<9x1x64xf32>
    %55 = arith.subf %53, %54 : vector<9x1x64xf32>
    %56 = vector.broadcast %55 : vector<9x1x64xf32> to vector<9x8x64xf32>
    %57 = arith.divf %52, %56 : vector<9x8x64xf32>
    %58 = vector.extract_strided_slice %37 {offsets = [1, 0, 0], sizes = [9, 8, 64], strides = [1, 1, 1]} : vector<10x8x64xf32> to vector<9x8x64xf32>
    %59 = arith.mulf %57, %58 : vector<9x8x64xf32>
    %60 = arith.addf %48, %59 : vector<9x8x64xf32>
    %61 = vector.extract_strided_slice %1 {offsets = [0, 0, 0], sizes = [8, 1, 64], strides = [1, 1, 1]} : vector<12x1x64xf32> to vector<8x1x64xf32>
    %62 = vector.broadcast %2 : vector<1x8x64xf32> to vector<8x8x64xf32>
    %63 = vector.broadcast %61 : vector<8x1x64xf32> to vector<8x8x64xf32>
    %64 = arith.subf %62, %63 : vector<8x8x64xf32>
    %65 = vector.extract_strided_slice %1 {offsets = [3, 0, 0], sizes = [8, 1, 64], strides = [1, 1, 1]} : vector<12x1x64xf32> to vector<8x1x64xf32>
    %66 = vector.extract_strided_slice %1 {offsets = [0, 0, 0], sizes = [8, 1, 64], strides = [1, 1, 1]} : vector<12x1x64xf32> to vector<8x1x64xf32>
    %67 = arith.subf %65, %66 : vector<8x1x64xf32>
    %68 = vector.broadcast %67 : vector<8x1x64xf32> to vector<8x8x64xf32>
    %69 = arith.divf %64, %68 : vector<8x8x64xf32>
    %70 = vector.extract_strided_slice %60 {offsets = [0, 0, 0], sizes = [8, 8, 64], strides = [1, 1, 1]} : vector<9x8x64xf32> to vector<8x8x64xf32>
    %71 = arith.mulf %69, %70 : vector<8x8x64xf32>
    %72 = vector.extract_strided_slice %1 {offsets = [4, 0, 0], sizes = [8, 1, 64], strides = [1, 1, 1]} : vector<12x1x64xf32> to vector<8x1x64xf32>
    %73 = vector.broadcast %72 : vector<8x1x64xf32> to vector<8x8x64xf32>
    %74 = vector.broadcast %2 : vector<1x8x64xf32> to vector<8x8x64xf32>
    %75 = arith.subf %73, %74 : vector<8x8x64xf32>
    %76 = vector.extract_strided_slice %1 {offsets = [4, 0, 0], sizes = [8, 1, 64], strides = [1, 1, 1]} : vector<12x1x64xf32> to vector<8x1x64xf32>
    %77 = vector.extract_strided_slice %1 {offsets = [1, 0, 0], sizes = [8, 1, 64], strides = [1, 1, 1]} : vector<12x1x64xf32> to vector<8x1x64xf32>
    %78 = arith.subf %76, %77 : vector<8x1x64xf32>
    %79 = vector.broadcast %78 : vector<8x1x64xf32> to vector<8x8x64xf32>
    %80 = arith.divf %75, %79 : vector<8x8x64xf32>
    %81 = vector.extract_strided_slice %60 {offsets = [1, 0, 0], sizes = [8, 8, 64], strides = [1, 1, 1]} : vector<9x8x64xf32> to vector<8x8x64xf32>
    %82 = arith.mulf %80, %81 : vector<8x8x64xf32>
    %83 = arith.addf %71, %82 : vector<8x8x64xf32>
    %cst_5 = arith.constant 0.000000e+00 : f32
    %84 = vector.broadcast %cst_5 : f32 to vector<8x64xf32>
    %85 = arith.subf %84, %0 : vector<8x64xf32>
    %86 = math.exp %85 : vector<8x64xf32>
    %cst_6 = arith.constant 1.000000e+00 : f32
    %87 = vector.broadcast %cst_6 : f32 to vector<8x64xf32>
    %88 = arith.addf %87, %86 : vector<8x64xf32>
    %cst_7 = arith.constant 1.000000e+00 : f32
    %89 = vector.broadcast %cst_7 : f32 to vector<8x64xf32>
    %90 = arith.divf %89, %88 : vector<8x64xf32>
    %91 = arith.mulf %0, %90 : vector<8x64xf32>
    %c0_8 = arith.constant 0 : index
    %c0_9 = arith.constant 0 : index
    %92 = vector.load %arg3[%c0_8, %c0_9] : memref<64x10xf32, #tpu.memory_space<vmem>>, vector<64x10xf32>
    %cst_10 = arith.constant dense<0.000000e+00> : vector<8x10xf32>
    %93 = tpu.matmul %91, %92, %cst_10 {dimension_numbers = #tpu.dot_dimension_numbers<[1], [0], [0], [1], [0, 0, 1, 1], [], []>} : vector<8x64xf32>, vector<64x10xf32>, vector<8x10xf32> -> vector<8x10xf32>
    %94 = vector.extract_strided_slice %83 {offsets = [0, 0, 0], sizes = [1, 8, 64], strides = [1, 1, 1]} : vector<8x8x64xf32> to vector<1x8x64xf32>
    %95 = vector.shape_cast %94 : vector<1x8x64xf32> to vector<8x64xf32>
    %c0_11 = arith.constant 0 : index
    %c0_12 = arith.constant 0 : index
    %c0_13 = arith.constant 0 : index
    %96 = vector.load %arg4[%c0_11, %c0_12, %c0_13] : memref<8x64x10xf32, #tpu.memory_space<vmem>>, vector<1x64x10xf32>
    %97 = vector.shape_cast %96 : vector<1x64x10xf32> to vector<64x10xf32>
    %cst_14 = arith.constant dense<0.000000e+00> : vector<8x10xf32>
    %98 = tpu.matmul %95, %97, %cst_14 {dimension_numbers = #tpu.dot_dimension_numbers<[1], [0], [0], [1], [0, 0, 1, 1], [], []>} : vector<8x64xf32>, vector<64x10xf32>, vector<8x10xf32> -> vector<8x10xf32>
    %99 = arith.addf %93, %98 : vector<8x10xf32>
    %100 = vector.extract_strided_slice %83 {offsets = [1, 0, 0], sizes = [1, 8, 64], strides = [1, 1, 1]} : vector<8x8x64xf32> to vector<1x8x64xf32>
    %101 = vector.shape_cast %100 : vector<1x8x64xf32> to vector<8x64xf32>
    %c1 = arith.constant 1 : index
    %c0_15 = arith.constant 0 : index
    %c0_16 = arith.constant 0 : index
    %102 = vector.load %arg4[%c1, %c0_15, %c0_16] : memref<8x64x10xf32, #tpu.memory_space<vmem>>, vector<1x64x10xf32>
    %103 = vector.shape_cast %102 : vector<1x64x10xf32> to vector<64x10xf32>
    %cst_17 = arith.constant dense<0.000000e+00> : vector<8x10xf32>
    %104 = tpu.matmul %101, %103, %cst_17 {dimension_numbers = #tpu.dot_dimension_numbers<[1], [0], [0], [1], [0, 0, 1, 1], [], []>} : vector<8x64xf32>, vector<64x10xf32>, vector<8x10xf32> -> vector<8x10xf32>
    %105 = arith.addf %99, %104 : vector<8x10xf32>
    %106 = vector.extract_strided_slice %83 {offsets = [2, 0, 0], sizes = [1, 8, 64], strides = [1, 1, 1]} : vector<8x8x64xf32> to vector<1x8x64xf32>
    %107 = vector.shape_cast %106 : vector<1x8x64xf32> to vector<8x64xf32>
    %c2 = arith.constant 2 : index
    %c0_18 = arith.constant 0 : index
    %c0_19 = arith.constant 0 : index
    %108 = vector.load %arg4[%c2, %c0_18, %c0_19] : memref<8x64x10xf32, #tpu.memory_space<vmem>>, vector<1x64x10xf32>
    %109 = vector.shape_cast %108 : vector<1x64x10xf32> to vector<64x10xf32>
    %cst_20 = arith.constant dense<0.000000e+00> : vector<8x10xf32>
    %110 = tpu.matmul %107, %109, %cst_20 {dimension_numbers = #tpu.dot_dimension_numbers<[1], [0], [0], [1], [0, 0, 1, 1], [], []>} : vector<8x64xf32>, vector<64x10xf32>, vector<8x10xf32> -> vector<8x10xf32>
    %111 = arith.addf %105, %110 : vector<8x10xf32>
    %112 = vector.extract_strided_slice %83 {offsets = [3, 0, 0], sizes = [1, 8, 64], strides = [1, 1, 1]} : vector<8x8x64xf32> to vector<1x8x64xf32>
    %113 = vector.shape_cast %112 : vector<1x8x64xf32> to vector<8x64xf32>
    %c3 = arith.constant 3 : index
    %c0_21 = arith.constant 0 : index
    %c0_22 = arith.constant 0 : index
    %114 = vector.load %arg4[%c3, %c0_21, %c0_22] : memref<8x64x10xf32, #tpu.memory_space<vmem>>, vector<1x64x10xf32>
    %115 = vector.shape_cast %114 : vector<1x64x10xf32> to vector<64x10xf32>
    %cst_23 = arith.constant dense<0.000000e+00> : vector<8x10xf32>
    %116 = tpu.matmul %113, %115, %cst_23 {dimension_numbers = #tpu.dot_dimension_numbers<[1], [0], [0], [1], [0, 0, 1, 1], [], []>} : vector<8x64xf32>, vector<64x10xf32>, vector<8x10xf32> -> vector<8x10xf32>
    %117 = arith.addf %111, %116 : vector<8x10xf32>
    %118 = vector.extract_strided_slice %83 {offsets = [4, 0, 0], sizes = [1, 8, 64], strides = [1, 1, 1]} : vector<8x8x64xf32> to vector<1x8x64xf32>
    %119 = vector.shape_cast %118 : vector<1x8x64xf32> to vector<8x64xf32>
    %c4 = arith.constant 4 : index
    %c0_24 = arith.constant 0 : index
    %c0_25 = arith.constant 0 : index
    %120 = vector.load %arg4[%c4, %c0_24, %c0_25] : memref<8x64x10xf32, #tpu.memory_space<vmem>>, vector<1x64x10xf32>
    %121 = vector.shape_cast %120 : vector<1x64x10xf32> to vector<64x10xf32>
    %cst_26 = arith.constant dense<0.000000e+00> : vector<8x10xf32>
    %122 = tpu.matmul %119, %121, %cst_26 {dimension_numbers = #tpu.dot_dimension_numbers<[1], [0], [0], [1], [0, 0, 1, 1], [], []>} : vector<8x64xf32>, vector<64x10xf32>, vector<8x10xf32> -> vector<8x10xf32>
    %123 = arith.addf %117, %122 : vector<8x10xf32>
    %124 = vector.extract_strided_slice %83 {offsets = [5, 0, 0], sizes = [1, 8, 64], strides = [1, 1, 1]} : vector<8x8x64xf32> to vector<1x8x64xf32>
    %125 = vector.shape_cast %124 : vector<1x8x64xf32> to vector<8x64xf32>
    %c5 = arith.constant 5 : index
    %c0_27 = arith.constant 0 : index
    %c0_28 = arith.constant 0 : index
    %126 = vector.load %arg4[%c5, %c0_27, %c0_28] : memref<8x64x10xf32, #tpu.memory_space<vmem>>, vector<1x64x10xf32>
    %127 = vector.shape_cast %126 : vector<1x64x10xf32> to vector<64x10xf32>
    %cst_29 = arith.constant dense<0.000000e+00> : vector<8x10xf32>
    %128 = tpu.matmul %125, %127, %cst_29 {dimension_numbers = #tpu.dot_dimension_numbers<[1], [0], [0], [1], [0, 0, 1, 1], [], []>} : vector<8x64xf32>, vector<64x10xf32>, vector<8x10xf32> -> vector<8x10xf32>
    %129 = arith.addf %123, %128 : vector<8x10xf32>
    %130 = vector.extract_strided_slice %83 {offsets = [6, 0, 0], sizes = [1, 8, 64], strides = [1, 1, 1]} : vector<8x8x64xf32> to vector<1x8x64xf32>
    %131 = vector.shape_cast %130 : vector<1x8x64xf32> to vector<8x64xf32>
    %c6 = arith.constant 6 : index
    %c0_30 = arith.constant 0 : index
    %c0_31 = arith.constant 0 : index
    %132 = vector.load %arg4[%c6, %c0_30, %c0_31] : memref<8x64x10xf32, #tpu.memory_space<vmem>>, vector<1x64x10xf32>
    %133 = vector.shape_cast %132 : vector<1x64x10xf32> to vector<64x10xf32>
    %cst_32 = arith.constant dense<0.000000e+00> : vector<8x10xf32>
    %134 = tpu.matmul %131, %133, %cst_32 {dimension_numbers = #tpu.dot_dimension_numbers<[1], [0], [0], [1], [0, 0, 1, 1], [], []>} : vector<8x64xf32>, vector<64x10xf32>, vector<8x10xf32> -> vector<8x10xf32>
    %135 = arith.addf %129, %134 : vector<8x10xf32>
    %136 = vector.extract_strided_slice %83 {offsets = [7, 0, 0], sizes = [1, 8, 64], strides = [1, 1, 1]} : vector<8x8x64xf32> to vector<1x8x64xf32>
    %137 = vector.shape_cast %136 : vector<1x8x64xf32> to vector<8x64xf32>
    %c7 = arith.constant 7 : index
    %c0_33 = arith.constant 0 : index
    %c0_34 = arith.constant 0 : index
    %138 = vector.load %arg4[%c7, %c0_33, %c0_34] : memref<8x64x10xf32, #tpu.memory_space<vmem>>, vector<1x64x10xf32>
    %139 = vector.shape_cast %138 : vector<1x64x10xf32> to vector<64x10xf32>
    %cst_35 = arith.constant dense<0.000000e+00> : vector<8x10xf32>
    %140 = tpu.matmul %137, %139, %cst_35 {dimension_numbers = #tpu.dot_dimension_numbers<[1], [0], [0], [1], [0, 0, 1, 1], [], []>} : vector<8x64xf32>, vector<64x10xf32>, vector<8x10xf32> -> vector<8x10xf32>
    %141 = arith.addf %135, %140 : vector<8x10xf32>
    %142 = math.tanh %141 : vector<8x10xf32>
    %cst_36 = arith.constant 1.000000e+00 : f32
    %143 = vector.broadcast %cst_36 : f32 to vector<8x10xf32>
    %144 = arith.addf %142, %143 : vector<8x10xf32>
    %cst_37 = arith.constant 5.000000e-01 : f32
    %145 = vector.broadcast %cst_37 : f32 to vector<8x10xf32>
    %146 = arith.mulf %144, %145 : vector<8x10xf32>
    %c0_38 = arith.constant 0 : index
    %c0_39 = arith.constant 0 : index
    %147 = vector.load %arg5[%c0_38, %c0_39] : memref<8x10xf32, #tpu.memory_space<vmem>>, vector<8x10xf32>
    tpu.vector_store %arg5[%c0_38, %c0_39], %146 {strides = array<i32>} : memref<8x10xf32, #tpu.memory_space<vmem>>, vector<8x10xf32>,
    return
  }
  func.func @transform_0(%arg0: i32) -> (i32, i32) {
    %c0_i32 = arith.constant 0 : i32
    %c0_i32_0 = arith.constant 0 : i32
    return %arg0, %c0_i32 : i32, i32
  }
  func.func @transform_1(%arg0: i32) -> (i32, i32, i32) {
    %c0_i32 = arith.constant 0 : i32
    %c0_i32_0 = arith.constant 0 : i32
    %c0_i32_1 = arith.constant 0 : i32
    %c0_i32_2 = arith.constant 0 : i32
    return %c0_i32, %c0_i32_0, %c0_i32_1 : i32, i32, i32
  }
  func.func @transform_2(%arg0: i32) -> (i32, i32) {
    %c0_i32 = arith.constant 0 : i32
    %c0_i32_0 = arith.constant 0 : i32
    %c0_i32_1 = arith.constant 0 : i32
    return %c0_i32, %c0_i32_0 : i32, i32
  }
  func.func @transform_3(%arg0: i32) -> (i32, i32, i32) {
    %c0_i32 = arith.constant 0 : i32
    %c0_i32_0 = arith.constant 0 : i32
    %c0_i32_1 = arith.constant 0 : i32
    %c0_i32_2 = arith.constant 0 : i32
    return %c0_i32, %c0_i32_0, %c0_i32_1 : i32, i32, i32
  }
  func.func @transform_4(%arg0: i32) -> (i32, i32) {
    %c0_i32 = arith.constant 0 : i32
    %c0_i32_0 = arith.constant 0 : i32
    return %arg0, %c0_i32 : i32, i32
  }
}

</mosaic_0001>

<llo_original>
// kernel: tpu_custom_call.1
$region0: #{tpu_custom_call.1}
  #allocation0 [shape = 'u32[]', space=smem, size = 0x4, offset = 0x4, fixed_abs, tag = 'smem constant byte address 0x4 - core index']
  #allocation1 [shape = 'u32[72,128]{1,0:T(1,128)}', space=vmem, size = 0x9000, scoped, tag = 'internal scratch']
  %s0 = inlined_call_operand.vmem [shape: f32[8,64], index: 0, kind: input, shape index: {}]
  %s1 = inlined_call_operand.vmem [shape: f32[12,1,64], index: 1, kind: input, shape index: {}]
  %s2 = inlined_call_operand.vmem [shape: f32[64,10], index: 2, kind: input, shape index: {}]
  %s3 = inlined_call_operand.vmem [shape: f32[8,64,10], index: 3, kind: input, shape index: {}]
  %s4 = inlined_call_operand.hbm [shape: f32[8,10], index: 4, kind: output, shape index: {}]
  %s5 = sld [smem:[#allocation0]]
  $region26: #{tpu_custom_call.1} parent=0
    _
  %s7 = ssub.s32 1, %s5
  %s8 = scalar_select 0, %s7, %s5
  $region1: #{tpu_custom_call.1} parent=0
    #allocation2 [shape = 'u8[4096]{0}', space=vmem, size = 0x1000, scoped, tag = 'output window, operand 0, single buffered']
    #allocation3 [shape = 's32[1]{0}', space=sflag, size = 0x4, scoped, tag = 'scoped memory for tpu_custom_call.1']
    %9 = vsyncpa [#allocation3], 0
    // Predicated region
    $region2: #{tpu_custom_call.1} parent=1 // pred_check
      _
    $region3: #{tpu_custom_call.1} parent=1 // pred_check_branch
      %11 = sbr.rel (0) target = $region5
    $region4: #{tpu_custom_call.1} parent=1 // pred_region
      _
    $region5: #{tpu_custom_call.1} parent=1 // pred_fallthru
      _
    // Predicated region
    $region6: #{tpu_custom_call.1} parent=1 // pred_check
      _
    $region7: #{tpu_custom_call.1} parent=1 // pred_check_branch
      %13 = sbr.rel (0) target = $region9
    $region8: #{tpu_custom_call.1} parent=1 // pred_region
      _
    $region9: #{tpu_custom_call.1} parent=1 // pred_fallthru
      _
    // Predicated region
    $region10: #{tpu_custom_call.1} parent=1 // pred_check
      _
    $region11: #{tpu_custom_call.1} parent=1 // pred_check_branch
      %15 = sbr.rel (0) target = $region13
    $region12: #{tpu_custom_call.1} parent=1 // pred_region
      _
    $region13: #{tpu_custom_call.1} parent=1 // pred_fallthru
      _
    // Predicated region
    $region14: #{tpu_custom_call.1} parent=1 // pred_check
      _
    $region15: #{tpu_custom_call.1} parent=1 // pred_check_branch
      %17 = sbr.rel (0) target = $region17
    $region16: #{tpu_custom_call.1} parent=1 // pred_region
      _
    $region17: #{tpu_custom_call.1} parent=1 // pred_fallthru
      _
    %v18 = vld [vmem:[%s0] sm:$0xff]
    %v19 = vld [vmem:[%s1] sm:$0x1]
    %v20 = vld [vmem:[%s1 + $0x1] sm:$0x1]
    %v21 = vld [vmem:[%s1 + $0x2] sm:$0x1]
    %v22 = vld [vmem:[%s1 + $0x3] sm:$0x1]
    %v23 = vld [vmem:[%s1 + $0x4] sm:$0x1]
    %v24 = vld [vmem:[%s1 + $0x5] sm:$0x1]
    %v25 = vld [vmem:[%s1 + $0x6] sm:$0x1]
    %v26 = vld [vmem:[%s1 + $0x7] sm:$0x1]
    %v27 = vld [vmem:[%s1 + $0x8] sm:$0x1]
    %v28 = vld [vmem:[%s1 + $0x9] sm:$0x1]
    %v29 = vld [vmem:[%s1 + $0xa] sm:$0x1]
    %v30 = vld [vmem:[%s1 + $0xb] sm:$0x1]
    %v42 = vperm.slane %v19, 0
    %v43 = vperm.slane %v20, 0
    %v44 = vperm.slane %v21, 0
    %v45 = vperm.slane %v22, 0
    %v46 = vperm.slane %v23, 0
    %v47 = vperm.slane %v24, 0
    %v48 = vperm.slane %v25, 0
    %v49 = vperm.slane %v26, 0
    %v50 = vperm.slane %v27, 0
    %v51 = vperm.slane %v28, 0
    %v52 = vperm.slane %v29, 0
    %vm64 = vcmp.ge.f32.partialorder %v18, %v42
    %vm65 = vcmp.ge.f32.partialorder %v18, %v43
    %vm66 = vcmp.ge.f32.partialorder %v18, %v44
    %vm67 = vcmp.ge.f32.partialorder %v18, %v45
    %vm68 = vcmp.ge.f32.partialorder %v18, %v46
    %vm69 = vcmp.ge.f32.partialorder %v18, %v47
    %vm70 = vcmp.ge.f32.partialorder %v18, %v48
    %vm71 = vcmp.ge.f32.partialorder %v18, %v49
    %vm72 = vcmp.ge.f32.partialorder %v18, %v50
    %vm73 = vcmp.ge.f32.partialorder %v18, %v51
    %vm74 = vcmp.ge.f32.partialorder %v18, %v52
    %v76 = vperm.slane %v30, 0
    %vm78 = vcmp.lt.f32.partialorder %v18, %v43
    %vm79 = vcmp.lt.f32.partialorder %v18, %v44
    %vm80 = vcmp.lt.f32.partialorder %v18, %v45
    %vm81 = vcmp.lt.f32.partialorder %v18, %v46
    %vm82 = vcmp.lt.f32.partialorder %v18, %v47
    %vm83 = vcmp.lt.f32.partialorder %v18, %v48
    %vm84 = vcmp.lt.f32.partialorder %v18, %v49
    %vm85 = vcmp.lt.f32.partialorder %v18, %v50
    %vm86 = vcmp.lt.f32.partialorder %v18, %v51
    %vm87 = vcmp.lt.f32.partialorder %v18, %v52
    %vm88 = vcmp.lt.f32.partialorder %v18, %v76
    %vm89 = vmand %vm64, %vm78
    %vm90 = vmand %vm65, %vm79
    %vm91 = vmand %vm66, %vm80
    %vm92 = vmand %vm67, %vm81
    %vm93 = vmand %vm68, %vm82
    %vm94 = vmand %vm69, %vm83
    %vm95 = vmand %vm70, %vm84
    %vm96 = vmand %vm71, %vm85
    %vm97 = vmand %vm72, %vm86
    %vm98 = vmand %vm73, %vm87
    %vm99 = vmand %vm74, %vm88
    %v100 = vsel %vm89, 1.0, 0.0
    %v101 = vsel %vm90, 1.0, 0.0
    %v102 = vsel %vm91, 1.0, 0.0
    %v103 = vsel %vm92, 1.0, 0.0
    %v104 = vsel %vm93, 1.0, 0.0
    %v105 = vsel %vm94, 1.0, 0.0
    %v106 = vsel %vm95, 1.0, 0.0
    %v107 = vsel %vm96, 1.0, 0.0
    %v108 = vsel %vm97, 1.0, 0.0
    %v109 = vsel %vm98, 1.0, 0.0
    %v110 = vsel %vm99, 1.0, 0.0
    %v111 = vsub.f32 %v18, %v42
    %v112 = vsub.f32 %v18, %v43
    %v113 = vsub.f32 %v18, %v44
    %v114 = vsub.f32 %v18, %v45
    %v115 = vsub.f32 %v18, %v46
    %v116 = vsub.f32 %v18, %v47
    %v117 = vsub.f32 %v18, %v48
    %v118 = vsub.f32 %v18, %v49
    %v119 = vsub.f32 %v18, %v50
    %v120 = vsub.f32 %v18, %v51
    %v121 = vsub.f32 %v20, %v19
    %v122 = vsub.f32 %v21, %v20
    %v123 = vsub.f32 %v22, %v21
    %v124 = vsub.f32 %v23, %v22
    %v125 = vsub.f32 %v24, %v23
    %v126 = vsub.f32 %v25, %v24
    %v127 = vsub.f32 %v26, %v25
    %v128 = vsub.f32 %v27, %v26
    %v129 = vsub.f32 %v28, %v27
    %v130 = vsub.f32 %v29, %v28
    %v141 = vperm.slane %v121, 0
    %v142 = vperm.slane %v122, 0
    %v143 = vperm.slane %v123, 0
    %v144 = vperm.slane %v124, 0
    %v145 = vperm.slane %v125, 0
    %v146 = vperm.slane %v126, 0
    %v147 = vperm.slane %v127, 0
    %v148 = vperm.slane %v128, 0
    %v149 = vperm.slane %v129, 0
    %v150 = vperm.slane %v130, 0
    %v161 = vrcp.pop %v141
    %v162 = vmul.f32 %v141, %v161
    %v163 = vsub.f32 1.0, %v162
    %v164 = vmul.f32 %v161, %v163
    %v165 = vadd.f32 %v161, %v164
    %vm166 = vweird.f32 %v141
    %vm167 = vweird.f32 %v161
    %vm168 = vmor %vm166, %vm167
    %v169 = vsel %vm168, %v161, %v165
    %v170 = vand.u32 2147483647, %v141
    %vm171 = vcmp.eq.f32.partialorder %v170, 8.507059e+37
    %v172 = vand.u32 %v141, 2147483648
    %v173 = vor.u32 1.1754944e-38, %v172
    %v174 = vsel %vm171, %v173, %v169
    %v175 = vmul.f32 %v111, %v174
    %v176 = vrcp.pop %v142
    %v177 = vmul.f32 %v142, %v176
    %v178 = vsub.f32 1.0, %v177
    %v179 = vmul.f32 %v176, %v178
    %v180 = vadd.f32 %v176, %v179
    %vm181 = vweird.f32 %v142
    %vm182 = vweird.f32 %v176
    %vm183 = vmor %vm181, %vm182
    %v184 = vsel %vm183, %v176, %v180
    %v185 = vand.u32 2147483647, %v142
    %vm186 = vcmp.eq.f32.partialorder %v185, 8.507059e+37
    %v187 = vand.u32 %v142, 2147483648
    %v188 = vor.u32 1.1754944e-38, %v187
    %v189 = vsel %vm186, %v188, %v184
    %v190 = vmul.f32 %v112, %v189
    %v191 = vrcp.pop %v143
    %v192 = vmul.f32 %v143, %v191
    %v193 = vsub.f32 1.0, %v192
    %v194 = vmul.f32 %v191, %v193
    %v195 = vadd.f32 %v191, %v194
    %vm196 = vweird.f32 %v143
    %vm197 = vweird.f32 %v191
    %vm198 = vmor %vm196, %vm197
    %v199 = vsel %vm198, %v191, %v195
    %v200 = vand.u32 2147483647, %v143
    %vm201 = vcmp.eq.f32.partialorder %v200, 8.507059e+37
    %v202 = vand.u32 %v143, 2147483648
    %v203 = vor.u32 1.1754944e-38, %v202
    %v204 = vsel %vm201, %v203, %v199
    %v205 = vmul.f32 %v113, %v204
    %v206 = vrcp.pop %v144
    %v207 = vmul.f32 %v144, %v206
    %v208 = vsub.f32 1.0, %v207
    %v209 = vmul.f32 %v206, %v208
    %v210 = vadd.f32 %v206, %v209
    %vm211 = vweird.f32 %v144
    %vm212 = vweird.f32 %v206
    %vm213 = vmor %vm211, %vm212
    %v214 = vsel %vm213, %v206, %v210
    %v215 = vand.u32 2147483647, %v144
    %vm216 = vcmp.eq.f32.partialorder %v215, 8.507059e+37
    %v217 = vand.u32 %v144, 2147483648
    %v218 = vor.u32 1.1754944e-38, %v217
    %v219 = vsel %vm216, %v218, %v214
    %v220 = vmul.f32 %v114, %v219
    %v221 = vrcp.pop %v145
    %v222 = vmul.f32 %v145, %v221
    %v223 = vsub.f32 1.0, %v222
    %v224 = vmul.f32 %v221, %v223
    %v225 = vadd.f32 %v221, %v224
    %vm226 = vweird.f32 %v145
    %vm227 = vweird.f32 %v221
    %vm228 = vmor %vm226, %vm227
    %v229 = vsel %vm228, %v221, %v225
    %v230 = vand.u32 2147483647, %v145
    %vm231 = vcmp.eq.f32.partialorder %v230, 8.507059e+37
    %v232 = vand.u32 %v145, 2147483648
    %v233 = vor.u32 1.1754944e-38, %v232
    %v234 = vsel %vm231, %v233, %v229
    %v235 = vmul.f32 %v115, %v234
    %v236 = vrcp.pop %v146
    %v237 = vmul.f32 %v146, %v236
    %v238 = vsub.f32 1.0, %v237
    %v239 = vmul.f32 %v236, %v238
    %v240 = vadd.f32 %v236, %v239
    %vm241 = vweird.f32 %v146
    %vm242 = vweird.f32 %v236
    %vm243 = vmor %vm241, %vm242
    %v244 = vsel %vm243, %v236, %v240
    %v245 = vand.u32 2147483647, %v146
    %vm246 = vcmp.eq.f32.partialorder %v245, 8.507059e+37
    %v247 = vand.u32 %v146, 2147483648
    %v248 = vor.u32 1.1754944e-38, %v247
    %v249 = vsel %vm246, %v248, %v244
    %v250 = vmul.f32 %v116, %v249
    %v251 = vrcp.pop %v147
    %v252 = vmul.f32 %v147, %v251
    %v253 = vsub.f32 1.0, %v252
    %v254 = vmul.f32 %v251, %v253
    %v255 = vadd.f32 %v251, %v254
    %vm256 = vweird.f32 %v147
    %vm257 = vweird.f32 %v251
    %vm258 = vmor %vm256, %vm257
    %v259 = vsel %vm258, %v251, %v255
    %v260 = vand.u32 2147483647, %v147
    %vm261 = vcmp.eq.f32.partialorder %v260, 8.507059e+37
    %v262 = vand.u32 %v147, 2147483648
    %v263 = vor.u32 1.1754944e-38, %v262
    %v264 = vsel %vm261, %v263, %v259
    %v265 = vmul.f32 %v117, %v264
    %v266 = vrcp.pop %v148
    %v267 = vmul.f32 %v148, %v266
    %v268 = vsub.f32 1.0, %v267
    %v269 = vmul.f32 %v266, %v268
    %v270 = vadd.f32 %v266, %v269
    %vm271 = vweird.f32 %v148
    %vm272 = vweird.f32 %v266
    %vm273 = vmor %vm271, %vm272
    %v274 = vsel %vm273, %v266, %v270
    %v275 = vand.u32 2147483647, %v148
    %vm276 = vcmp.eq.f32.partialorder %v275, 8.507059e+37
    %v277 = vand.u32 %v148, 2147483648
    %v278 = vor.u32 1.1754944e-38, %v277
    %v279 = vsel %vm276, %v278, %v274
    %v280 = vmul.f32 %v118, %v279
    %v281 = vrcp.pop %v149
    %v282 = vmul.f32 %v149, %v281
    %v283 = vsub.f32 1.0, %v282
    %v284 = vmul.f32 %v281, %v283
    %v285 = vadd.f32 %v281, %v284
    %vm286 = vweird.f32 %v149
    %vm287 = vweird.f32 %v281
    %vm288 = vmor %vm286, %vm287
    %v289 = vsel %vm288, %v281, %v285
    %v290 = vand.u32 2147483647, %v149
    %vm291 = vcmp.eq.f32.partialorder %v290, 8.507059e+37
    %v292 = vand.u32 %v149, 2147483648
    %v293 = vor.u32 1.1754944e-38, %v292
    %v294 = vsel %vm291, %v293, %v289
    %v295 = vmul.f32 %v119, %v294
    %v296 = vrcp.pop %v150
    %v297 = vmul.f32 %v150, %v296
    %v298 = vsub.f32 1.0, %v297
    %v299 = vmul.f32 %v296, %v298
    %v300 = vadd.f32 %v296, %v299
    %vm301 = vweird.f32 %v150
    %vm302 = vweird.f32 %v296
    %vm303 = vmor %vm301, %vm302
    %v304 = vsel %vm303, %v296, %v300
    %v305 = vand.u32 2147483647, %v150
    %vm306 = vcmp.eq.f32.partialorder %v305, 8.507059e+37
    %v307 = vand.u32 %v150, 2147483648
    %v308 = vor.u32 1.1754944e-38, %v307
    %v309 = vsel %vm306, %v308, %v304
    %v310 = vmul.f32 %v120, %v309
    %v311 = vmul.f32 %v175, %v100
    %v312 = vmul.f32 %v190, %v101
    %v313 = vmul.f32 %v205, %v102
    %v314 = vmul.f32 %v220, %v103
    %v315 = vmul.f32 %v235, %v104
    %v316 = vmul.f32 %v250, %v105
    %v317 = vmul.f32 %v265, %v106
    %v318 = vmul.f32 %v280, %v107
    %v319 = vmul.f32 %v295, %v108
    %v320 = vmul.f32 %v310, %v109
    %v321 = vsub.f32 %v44, %v18
    %v322 = vsub.f32 %v45, %v18
    %v323 = vsub.f32 %v46, %v18
    %v324 = vsub.f32 %v47, %v18
    %v325 = vsub.f32 %v48, %v18
    %v326 = vsub.f32 %v49, %v18
    %v327 = vsub.f32 %v50, %v18
    %v328 = vsub.f32 %v51, %v18
    %v329 = vsub.f32 %v52, %v18
    %v330 = vsub.f32 %v76, %v18
    %v331 = vsub.f32 %v30, %v29
    %v333 = vperm.slane %v331, 0
    %v335 = vmul.f32 %v321, %v189
    %v336 = vmul.f32 %v322, %v204
    %v337 = vmul.f32 %v323, %v219
    %v338 = vmul.f32 %v324, %v234
    %v339 = vmul.f32 %v325, %v249
    %v340 = vmul.f32 %v326, %v264
    %v341 = vmul.f32 %v327, %v279
    %v342 = vmul.f32 %v328, %v294
    %v343 = vmul.f32 %v329, %v309
    %v344 = vrcp.pop %v333
    %v345 = vmul.f32 %v333, %v344
    %v346 = vsub.f32 1.0, %v345
    %v347 = vmul.f32 %v344, %v346
    %v348 = vadd.f32 %v344, %v347
    %vm349 = vweird.f32 %v333
    %vm350 = vweird.f32 %v344
    %vm351 = vmor %vm349, %vm350
    %v352 = vsel %vm351, %v344, %v348
    %v353 = vand.u32 2147483647, %v333
    %vm354 = vcmp.eq.f32.partialorder %v353, 8.507059e+37
    %v355 = vand.u32 %v333, 2147483648
    %v356 = vor.u32 1.1754944e-38, %v355
    %v357 = vsel %vm354, %v356, %v352
    %v358 = vmul.f32 %v330, %v357
    %v359 = vmul.f32 %v335, %v101
    %v360 = vmul.f32 %v336, %v102
    %v361 = vmul.f32 %v337, %v103
    %v362 = vmul.f32 %v338, %v104
    %v363 = vmul.f32 %v339, %v105
    %v364 = vmul.f32 %v340, %v106
    %v365 = vmul.f32 %v341, %v107
    %v366 = vmul.f32 %v342, %v108
    %v367 = vmul.f32 %v343, %v109
    %v368 = vmul.f32 %v358, %v110
    %v369 = vadd.f32 %v311, %v359
    %v370 = vadd.f32 %v312, %v360
    %v371 = vadd.f32 %v313, %v361
    %v372 = vadd.f32 %v314, %v362
    %v373 = vadd.f32 %v315, %v363
    %v374 = vadd.f32 %v316, %v364
    %v375 = vadd.f32 %v317, %v365
    %v376 = vadd.f32 %v318, %v366
    %v377 = vadd.f32 %v319, %v367
    %v378 = vadd.f32 %v320, %v368
    %v379 = vsub.f32 %v21, %v19
    %v380 = vsub.f32 %v22, %v20
    %v381 = vsub.f32 %v23, %v21
    %v382 = vsub.f32 %v24, %v22
    %v383 = vsub.f32 %v25, %v23
    %v384 = vsub.f32 %v26, %v24
    %v385 = vsub.f32 %v27, %v25
    %v386 = vsub.f32 %v28, %v26
    %v387 = vsub.f32 %v29, %v27
    %v397 = vperm.slane %v379, 0
    %v398 = vperm.slane %v380, 0
    %v399 = vperm.slane %v381, 0
    %v400 = vperm.slane %v382, 0
    %v401 = vperm.slane %v383, 0
    %v402 = vperm.slane %v384, 0
    %v403 = vperm.slane %v385, 0
    %v404 = vperm.slane %v386, 0
    %v405 = vperm.slane %v387, 0
    %v415 = vrcp.pop %v397
    %v416 = vmul.f32 %v397, %v415
    %v417 = vsub.f32 1.0, %v416
    %v418 = vmul.f32 %v415, %v417
    %v419 = vadd.f32 %v415, %v418
    %vm420 = vweird.f32 %v397
    %vm421 = vweird.f32 %v415
    %vm422 = vmor %vm420, %vm421
    %v423 = vsel %vm422, %v415, %v419
    %v424 = vand.u32 2147483647, %v397
    %vm425 = vcmp.eq.f32.partialorder %v424, 8.507059e+37
    %v426 = vand.u32 %v397, 2147483648
    %v427 = vor.u32 1.1754944e-38, %v426
    %v428 = vsel %vm425, %v427, %v423
    %v429 = vmul.f32 %v111, %v428
    %v430 = vrcp.pop %v398
    %v431 = vmul.f32 %v398, %v430
    %v432 = vsub.f32 1.0, %v431
    %v433 = vmul.f32 %v430, %v432
    %v434 = vadd.f32 %v430, %v433
    %vm435 = vweird.f32 %v398
    %vm436 = vweird.f32 %v430
    %vm437 = vmor %vm435, %vm436
    %v438 = vsel %vm437, %v430, %v434
    %v439 = vand.u32 2147483647, %v398
    %vm440 = vcmp.eq.f32.partialorder %v439, 8.507059e+37
    %v441 = vand.u32 %v398, 2147483648
    %v442 = vor.u32 1.1754944e-38, %v441
    %v443 = vsel %vm440, %v442, %v438
    %v444 = vmul.f32 %v112, %v443
    %v445 = vrcp.pop %v399
    %v446 = vmul.f32 %v399, %v445
    %v447 = vsub.f32 1.0, %v446
    %v448 = vmul.f32 %v445, %v447
    %v449 = vadd.f32 %v445, %v448
    %vm450 = vweird.f32 %v399
    %vm451 = vweird.f32 %v445
    %vm452 = vmor %vm450, %vm451
    %v453 = vsel %vm452, %v445, %v449
    %v454 = vand.u32 2147483647, %v399
    %vm455 = vcmp.eq.f32.partialorder %v454, 8.507059e+37
    %v456 = vand.u32 %v399, 2147483648
    %v457 = vor.u32 1.1754944e-38, %v456
    %v458 = vsel %vm455, %v457, %v453
    %v459 = vmul.f32 %v113, %v458
    %v460 = vrcp.pop %v400
    %v461 = vmul.f32 %v400, %v460
    %v462 = vsub.f32 1.0, %v461
    %v463 = vmul.f32 %v460, %v462
    %v464 = vadd.f32 %v460, %v463
    %vm465 = vweird.f32 %v400
    %vm466 = vweird.f32 %v460
    %vm467 = vmor %vm465, %vm466
    %v468 = vsel %vm467, %v460, %v464
    %v469 = vand.u32 2147483647, %v400
    %vm470 = vcmp.eq.f32.partialorder %v469, 8.507059e+37
    %v471 = vand.u32 %v400, 2147483648
    %v472 = vor.u32 1.1754944e-38, %v471
    %v473 = vsel %vm470, %v472, %v468
    %v474 = vmul.f32 %v114, %v473
    %v475 = vrcp.pop %v401
    %v476 = vmul.f32 %v401, %v475
    %v477 = vsub.f32 1.0, %v476
    %v478 = vmul.f32 %v475, %v477
    %v479 = vadd.f32 %v475, %v478
    %vm480 = vweird.f32 %v401
    %vm481 = vweird.f32 %v475
    %vm482 = vmor %vm480, %vm481
    %v483 = vsel %vm482, %v475, %v479
    %v484 = vand.u32 2147483647, %v401
    %vm485 = vcmp.eq.f32.partialorder %v484, 8.507059e+37
    %v486 = vand.u32 %v401, 2147483648
    %v487 = vor.u32 1.1754944e-38, %v486
    %v488 = vsel %vm485, %v487, %v483
    %v489 = vmul.f32 %v115, %v488
    %v490 = vrcp.pop %v402
    %v491 = vmul.f32 %v402, %v490
    %v492 = vsub.f32 1.0, %v491
    %v493 = vmul.f32 %v490, %v492
    %v494 = vadd.f32 %v490, %v493
    %vm495 = vweird.f32 %v402
    %vm496 = vweird.f32 %v490
    %vm497 = vmor %vm495, %vm496
    %v498 = vsel %vm497, %v490, %v494
    %v499 = vand.u32 2147483647, %v402
    %vm500 = vcmp.eq.f32.partialorder %v499, 8.507059e+37
    %v501 = vand.u32 %v402, 2147483648
    %v502 = vor.u32 1.1754944e-38, %v501
    %v503 = vsel %vm500, %v502, %v498
    %v504 = vmul.f32 %v116, %v503
    %v505 = vrcp.pop %v403
    %v506 = vmul.f32 %v403, %v505
    %v507 = vsub.f32 1.0, %v506
    %v508 = vmul.f32 %v505, %v507
    %v509 = vadd.f32 %v505, %v508
    %vm510 = vweird.f32 %v403
    %vm511 = vweird.f32 %v505
    %vm512 = vmor %vm510, %vm511
    %v513 = vsel %vm512, %v505, %v509
    %v514 = vand.u32 2147483647, %v403
    %vm515 = vcmp.eq.f32.partialorder %v514, 8.507059e+37
    %v516 = vand.u32 %v403, 2147483648
    %v517 = vor.u32 1.1754944e-38, %v516
    %v518 = vsel %vm515, %v517, %v513
    %v519 = vmul.f32 %v117, %v518
    %v520 = vrcp.pop %v404
    %v521 = vmul.f32 %v404, %v520
    %v522 = vsub.f32 1.0, %v521
    %v523 = vmul.f32 %v520, %v522
    %v524 = vadd.f32 %v520, %v523
    %vm525 = vweird.f32 %v404
    %vm526 = vweird.f32 %v520
    %vm527 = vmor %vm525, %vm526
    %v528 = vsel %vm527, %v520, %v524
    %v529 = vand.u32 2147483647, %v404
    %vm530 = vcmp.eq.f32.partialorder %v529, 8.507059e+37
    %v531 = vand.u32 %v404, 2147483648
    %v532 = vor.u32 1.1754944e-38, %v531
    %v533 = vsel %vm530, %v532, %v528
    %v534 = vmul.f32 %v118, %v533
    %v535 = vrcp.pop %v405
    %v536 = vmul.f32 %v405, %v535
    %v537 = vsub.f32 1.0, %v536
    %v538 = vmul.f32 %v535, %v537
    %v539 = vadd.f32 %v535, %v538
    %vm540 = vweird.f32 %v405
    %vm541 = vweird.f32 %v535
    %vm542 = vmor %vm540, %vm541
    %v543 = vsel %vm542, %v535, %v539
    %v544 = vand.u32 2147483647, %v405
    %vm545 = vcmp.eq.f32.partialorder %v544, 8.507059e+37
    %v546 = vand.u32 %v405, 2147483648
    %v547 = vor.u32 1.1754944e-38, %v546
    %v548 = vsel %vm545, %v547, %v543
    %v549 = vmul.f32 %v119, %v548
    %v550 = vmul.f32 %v429, %v369
    %v551 = vmul.f32 %v444, %v370
    %v552 = vmul.f32 %v459, %v371
    %v553 = vmul.f32 %v474, %v372
    %v554 = vmul.f32 %v489, %v373
    %v555 = vmul.f32 %v504, %v374
    %v556 = vmul.f32 %v519, %v375
    %v557 = vmul.f32 %v534, %v376
    %v558 = vmul.f32 %v549, %v377
    %v559 = vsub.f32 %v30, %v28
    %v561 = vperm.slane %v559, 0
    %v563 = vmul.f32 %v322, %v443
    %v564 = vmul.f32 %v323, %v458
    %v565 = vmul.f32 %v324, %v473
    %v566 = vmul.f32 %v325, %v488
    %v567 = vmul.f32 %v326, %v503
    %v568 = vmul.f32 %v327, %v518
    %v569 = vmul.f32 %v328, %v533
    %v570 = vmul.f32 %v329, %v548
    %v571 = vrcp.pop %v561
    %v572 = vmul.f32 %v561, %v571
    %v573 = vsub.f32 1.0, %v572
    %v574 = vmul.f32 %v571, %v573
    %v575 = vadd.f32 %v571, %v574
    %vm576 = vweird.f32 %v561
    %vm577 = vweird.f32 %v571
    %vm578 = vmor %vm576, %vm577
    %v579 = vsel %vm578, %v571, %v575
    %v580 = vand.u32 2147483647, %v561
    %vm581 = vcmp.eq.f32.partialorder %v580, 8.507059e+37
    %v582 = vand.u32 %v561, 2147483648
    %v583 = vor.u32 1.1754944e-38, %v582
    %v584 = vsel %vm581, %v583, %v579
    %v585 = vmul.f32 %v330, %v584
    %v586 = vmul.f32 %v563, %v370
    %v587 = vmul.f32 %v564, %v371
    %v588 = vmul.f32 %v565, %v372
    %v589 = vmul.f32 %v566, %v373
    %v590 = vmul.f32 %v567, %v374
    %v591 = vmul.f32 %v568, %v375
    %v592 = vmul.f32 %v569, %v376
    %v593 = vmul.f32 %v570, %v377
    %v594 = vmul.f32 %v585, %v378
    %v595 = vadd.f32 %v550, %v586
    %v596 = vadd.f32 %v551, %v587
    %v597 = vadd.f32 %v552, %v588
    %v598 = vadd.f32 %v553, %v589
    %v599 = vadd.f32 %v554, %v590
    %v600 = vadd.f32 %v555, %v591
    %v601 = vadd.f32 %v556, %v592
    %v602 = vadd.f32 %v557, %v593
    %v603 = vadd.f32 %v558, %v594
    %v604 = vsub.f32 %v22, %v19
    %v605 = vsub.f32 %v23, %v20
    %v606 = vsub.f32 %v24, %v21
    %v607 = vsub.f32 %v25, %v22
    %v608 = vsub.f32 %v26, %v23
    %v609 = vsub.f32 %v27, %v24
    %v610 = vsub.f32 %v28, %v25
    %v611 = vsub.f32 %v29, %v26
    %v620 = vperm.slane %v604, 0
    %v621 = vperm.slane %v605, 0
    %v622 = vperm.slane %v606, 0
    %v623 = vperm.slane %v607, 0
    %v624 = vperm.slane %v608, 0
    %v625 = vperm.slane %v609, 0
    %v626 = vperm.slane %v610, 0
    %v627 = vperm.slane %v611, 0
    %v636 = vrcp.pop %v620
    %v637 = vmul.f32 %v620, %v636
    %v638 = vsub.f32 1.0, %v637
    %v639 = vmul.f32 %v636, %v638
    %v640 = vadd.f32 %v636, %v639
    %vm641 = vweird.f32 %v620
    %vm642 = vweird.f32 %v636
    %vm643 = vmor %vm641, %vm642
    %v644 = vsel %vm643, %v636, %v640
    %v645 = vand.u32 2147483647, %v620
    %vm646 = vcmp.eq.f32.partialorder %v645, 8.507059e+37
    %v647 = vand.u32 %v620, 2147483648
    %v648 = vor.u32 1.1754944e-38, %v647
    %v649 = vsel %vm646, %v648, %v644
    %v650 = vmul.f32 %v111, %v649
    %v651 = vrcp.pop %v621
    %v652 = vmul.f32 %v621, %v651
    %v653 = vsub.f32 1.0, %v652
    %v654 = vmul.f32 %v651, %v653
    %v655 = vadd.f32 %v651, %v654
    %vm656 = vweird.f32 %v621
    %vm657 = vweird.f32 %v651
    %vm658 = vmor %vm656, %vm657
    %v659 = vsel %vm658, %v651, %v655
    %v660 = vand.u32 2147483647, %v621
    %vm661 = vcmp.eq.f32.partialorder %v660, 8.507059e+37
    %v662 = vand.u32 %v621, 2147483648
    %v663 = vor.u32 1.1754944e-38, %v662
    %v664 = vsel %vm661, %v663, %v659
    %v665 = vmul.f32 %v112, %v664
    %v666 = vrcp.pop %v622
    %v667 = vmul.f32 %v622, %v666
    %v668 = vsub.f32 1.0, %v667
    %v669 = vmul.f32 %v666, %v668
    %v670 = vadd.f32 %v666, %v669
    %vm671 = vweird.f32 %v622
    %vm672 = vweird.f32 %v666
    %vm673 = vmor %vm671, %vm672
    %v674 = vsel %vm673, %v666, %v670
    %v675 = vand.u32 2147483647, %v622
    %vm676 = vcmp.eq.f32.partialorder %v675, 8.507059e+37
    %v677 = vand.u32 %v622, 2147483648
    %v678 = vor.u32 1.1754944e-38, %v677
    %v679 = vsel %vm676, %v678, %v674
    %v680 = vmul.f32 %v113, %v679
    %v681 = vrcp.pop %v623
    %v682 = vmul.f32 %v623, %v681
    %v683 = vsub.f32 1.0, %v682
    %v684 = vmul.f32 %v681, %v683
    %v685 = vadd.f32 %v681, %v684
    %vm686 = vweird.f32 %v623
    %vm687 = vweird.f32 %v681
    %vm688 = vmor %vm686, %vm687
    %v689 = vsel %vm688, %v681, %v685
    %v690 = vand.u32 2147483647, %v623
    %vm691 = vcmp.eq.f32.partialorder %v690, 8.507059e+37
    %v692 = vand.u32 %v623, 2147483648
    %v693 = vor.u32 1.1754944e-38, %v692
    %v694 = vsel %vm691, %v693, %v689
    %v695 = vmul.f32 %v114, %v694
    %v696 = vrcp.pop %v624
    %v697 = vmul.f32 %v624, %v696
    %v698 = vsub.f32 1.0, %v697
    %v699 = vmul.f32 %v696, %v698
    %v700 = vadd.f32 %v696, %v699
    %vm701 = vweird.f32 %v624
    %vm702 = vweird.f32 %v696
    %vm703 = vmor %vm701, %vm702
    %v704 = vsel %vm703, %v696, %v700
    %v705 = vand.u32 2147483647, %v624
    %vm706 = vcmp.eq.f32.partialorder %v705, 8.507059e+37
    %v707 = vand.u32 %v624, 2147483648
    %v708 = vor.u32 1.1754944e-38, %v707
    %v709 = vsel %vm706, %v708, %v704
    %v710 = vmul.f32 %v115, %v709
    %v711 = vrcp.pop %v625
    %v712 = vmul.f32 %v625, %v711
    %v713 = vsub.f32 1.0, %v712
    %v714 = vmul.f32 %v711, %v713
    %v715 = vadd.f32 %v711, %v714
    %vm716 = vweird.f32 %v625
    %vm717 = vweird.f32 %v711
    %vm718 = vmor %vm716, %vm717
    %v719 = vsel %vm718, %v711, %v715
    %v720 = vand.u32 2147483647, %v625
    %vm721 = vcmp.eq.f32.partialorder %v720, 8.507059e+37
    %v722 = vand.u32 %v625, 2147483648
    %v723 = vor.u32 1.1754944e-38, %v722
    %v724 = vsel %vm721, %v723, %v719
    %v725 = vmul.f32 %v116, %v724
    %v726 = vrcp.pop %v626
    %v727 = vmul.f32 %v626, %v726
    %v728 = vsub.f32 1.0, %v727
    %v729 = vmul.f32 %v726, %v728
    %v730 = vadd.f32 %v726, %v729
    %vm731 = vweird.f32 %v626
    %vm732 = vweird.f32 %v726
    %vm733 = vmor %vm731, %vm732
    %v734 = vsel %vm733, %v726, %v730
    %v735 = vand.u32 2147483647, %v626
    %vm736 = vcmp.eq.f32.partialorder %v735, 8.507059e+37
    %v737 = vand.u32 %v626, 2147483648
    %v738 = vor.u32 1.1754944e-38, %v737
    %v739 = vsel %vm736, %v738, %v734
    %v740 = vmul.f32 %v117, %v739
    %v741 = vrcp.pop %v627
    %v742 = vmul.f32 %v627, %v741
    %v743 = vsub.f32 1.0, %v742
    %v744 = vmul.f32 %v741, %v743
    %v745 = vadd.f32 %v741, %v744
    %vm746 = vweird.f32 %v627
    %vm747 = vweird.f32 %v741
    %vm748 = vmor %vm746, %vm747
    %v749 = vsel %vm748, %v741, %v745
    %v750 = vand.u32 2147483647, %v627
    %vm751 = vcmp.eq.f32.partialorder %v750, 8.507059e+37
    %v752 = vand.u32 %v627, 2147483648
    %v753 = vor.u32 1.1754944e-38, %v752
    %v754 = vsel %vm751, %v753, %v749
    %v755 = vmul.f32 %v118, %v754
    %v756 = vmul.f32 %v650, %v595
    %v757 = vmul.f32 %v665, %v596
    %v758 = vmul.f32 %v680, %v597
    %v759 = vmul.f32 %v695, %v598
    %v760 = vmul.f32 %v710, %v599
    %v761 = vmul.f32 %v725, %v600
    %v762 = vmul.f32 %v740, %v601
    %v763 = vmul.f32 %v755, %v602
    %v764 = vsub.f32 %v30, %v27
    %v766 = vperm.slane %v764, 0
    %v768 = vmul.f32 %v323, %v664
    %v769 = vmul.f32 %v324, %v679
    %v770 = vmul.f32 %v325, %v694
    %v771 = vmul.f32 %v326, %v709
    %v772 = vmul.f32 %v327, %v724
    %v773 = vmul.f32 %v328, %v739
    %v774 = vmul.f32 %v329, %v754
    %v775 = vrcp.pop %v766
    %v776 = vmul.f32 %v766, %v775
    %v777 = vsub.f32 1.0, %v776
    %v778 = vmul.f32 %v775, %v777
    %v779 = vadd.f32 %v775, %v778
    %vm780 = vweird.f32 %v766
    %vm781 = vweird.f32 %v775
    %vm782 = vmor %vm780, %vm781
    %v783 = vsel %vm782, %v775, %v779
    %v784 = vand.u32 2147483647, %v766
    %vm785 = vcmp.eq.f32.partialorder %v784, 8.507059e+37
    %v786 = vand.u32 %v766, 2147483648
    %v787 = vor.u32 1.1754944e-38, %v786
    %v788 = vsel %vm785, %v787, %v783
    %v789 = vmul.f32 %v330, %v788
    %v790 = vmul.f32 %v768, %v596
    %v791 = vmul.f32 %v769, %v597
    %v792 = vmul.f32 %v770, %v598
    %v793 = vmul.f32 %v771, %v599
    %v794 = vmul.f32 %v772, %v600
    %v795 = vmul.f32 %v773, %v601
    %v796 = vmul.f32 %v774, %v602
    %v797 = vmul.f32 %v789, %v603
    %v798 = vadd.f32 %v756, %v790
    %v799 = vadd.f32 %v757, %v791
    %v800 = vadd.f32 %v758, %v792
    %v801 = vadd.f32 %v759, %v793
    %v802 = vadd.f32 %v760, %v794
    %v803 = vadd.f32 %v761, %v795
    %v804 = vadd.f32 %v762, %v796
    %v805 = vadd.f32 %v763, %v797
    %v806 = vsub.f32 0.0, %v18
    %v807 = vmul.f32 %v806, 1.442695
    %v808 = vpow.pop %v807
    %v809 = vadd.f32 %v808, 1.0
    %v810 = vrcp.pop %v809
    %v811 = vmul.f32 %v809, %v810
    %v812 = vsub.f32 1.0, %v811
    %v813 = vmul.f32 %v810, %v812
    %v814 = vadd.f32 %v810, %v813
    %vm815 = vweird.f32 %v809
    %vm816 = vweird.f32 %v810
    %vm817 = vmor %vm815, %vm816
    %v818 = vsel %vm817, %v810, %v814
    %v819 = vand.u32 2147483647, %v809
    %vm820 = vcmp.eq.f32.partialorder %v819, 8.507059e+37
    %v821 = vand.u32 %v809, 2147483648
    %v822 = vor.u32 1.1754944e-38, %v821
    %v823 = vsel %vm820, %v822, %v818
    %v824 = vmul.f32 1.0, %v823
    %v825 = vmul.f32 %v18, %v824
    %v826 = vld [vmem:[%s2] sm:$0xff]
    %v827 = vld [vmem:[%s2 + $0x8] sm:$0xff]
    %v828 = vld [vmem:[%s2 + $0x10] sm:$0xff]
    %v829 = vld [vmem:[%s2 + $0x18] sm:$0xff]
    %v830 = vld [vmem:[%s2 + $0x20] sm:$0xff]
    %v831 = vld [vmem:[%s2 + $0x28] sm:$0xff]
    %v832 = vld [vmem:[%s2 + $0x30] sm:$0xff]
    %v833 = vld [vmem:[%s2 + $0x38] sm:$0xff]
    %v834 = vld [vmem:[%s3] sm:$0xff]
    %v835 = vld [vmem:[%s3 + $0x8] sm:$0xff]
    %v836 = vld [vmem:[%s3 + $0x10] sm:$0xff]
    %v837 = vld [vmem:[%s3 + $0x18] sm:$0xff]
    %v838 = vld [vmem:[%s3 + $0x20] sm:$0xff]
    %v839 = vld [vmem:[%s3 + $0x28] sm:$0xff]
    %v840 = vld [vmem:[%s3 + $0x30] sm:$0xff]
    %v841 = vld [vmem:[%s3 + $0x38] sm:$0xff]
    %vm842 = vcmask 523264
    %v844 = vsel %vm842, %v798, 0
    %846 = vmatpush.msra.mxu0 0.0
    %847 = vmatpush.msra.mxu0 0.0
    %848 = vmatpush.msra.mxu0 0.0
    %849 = vmatpush.msra.mxu0 0.0
    %850 = vmatpush.msra.mxu0 0.0
    %851 = vmatpush.msra.mxu0 0.0
    %852 = vmatpush.msra.mxu0 0.0
    %853 = vmatpush.msra.mxu0 0.0
    %854 = vmatpush.msra.mxu0 %v841
    %855 = vmatpush.msra.mxu0 %v840
    %856 = vmatpush.msra.mxu0 %v839
    %857 = vmatpush.msra.mxu0 %v838
    %858 = vmatpush.msra.mxu0 %v837
    %859 = vmatpush.msra.mxu0 %v836
    %860 = vmatpush.msra.mxu0 %v835
    %861 = vmatpush.msra.mxu0 %v834
    %862 = vmatmul.f32.gmra.mxu0 %v844
    %v863 = vpop.f32.mrf.mxu0
    %v864 = vadd.f32 0.0, %v863
    %865 = vdwg.mxu0
    %v867 = vsel %vm842, %v825, 0
    %869 = vmatpush.msra.mxu0 0.0
    %870 = vmatpush.msra.mxu0 0.0
    %871 = vmatpush.msra.mxu0 0.0
    %872 = vmatpush.msra.mxu0 0.0
    %873 = vmatpush.msra.mxu0 0.0
    %874 = vmatpush.msra.mxu0 0.0
    %875 = vmatpush.msra.mxu0 0.0
    %876 = vmatpush.msra.mxu0 0.0
    %877 = vmatpush.msra.mxu0 %v833
    %878 = vmatpush.msra.mxu0 %v832
    %879 = vmatpush.msra.mxu0 %v831
    %880 = vmatpush.msra.mxu0 %v830
    %881 = vmatpush.msra.mxu0 %v829
    %882 = vmatpush.msra.mxu0 %v828
    %883 = vmatpush.msra.mxu0 %v827
    %884 = vmatpush.msra.mxu0 %v826
    %885 = vmatmul.f32.gmra.mxu0 %v867
    %v886 = vpop.f32.mrf.mxu0
    %v887 = vadd.f32 %v864, %v886
    %888 = vdwg.mxu0
    %s889 = scalar_lea.vmem %s3, 64
    %v890 = vld [vmem:[%s889] sm:$0xff]
    %v891 = vld [vmem:[%s889 + $0x8] sm:$0xff]
    %v892 = vld [vmem:[%s889 + $0x10] sm:$0xff]
    %v893 = vld [vmem:[%s889 + $0x18] sm:$0xff]
    %v894 = vld [vmem:[%s889 + $0x20] sm:$0xff]
    %v895 = vld [vmem:[%s889 + $0x28] sm:$0xff]
    %v896 = vld [vmem:[%s889 + $0x30] sm:$0xff]
    %v897 = vld [vmem:[%s889 + $0x38] sm:$0xff]
    %v899 = vsel %vm842, %v799, 0
    %901 = vmatpush.msra.mxu0 0.0
    %902 = vmatpush.msra.mxu0 0.0
    %903 = vmatpush.msra.mxu0 0.0
    %904 = vmatpush.msra.mxu0 0.0
    %905 = vmatpush.msra.mxu0 0.0
    %906 = vmatpush.msra.mxu0 0.0
    %907 = vmatpush.msra.mxu0 0.0
    %908 = vmatpush.msra.mxu0 0.0
    %909 = vmatpush.msra.mxu0 %v897
    %910 = vmatpush.msra.mxu0 %v896
    %911 = vmatpush.msra.mxu0 %v895
    %912 = vmatpush.msra.mxu0 %v894
    %913 = vmatpush.msra.mxu0 %v893
    %914 = vmatpush.msra.mxu0 %v892
    %915 = vmatpush.msra.mxu0 %v891
    %916 = vmatpush.msra.mxu0 %v890
    %917 = vmatmul.f32.gmra.mxu0 %v899
    %v918 = vpop.f32.mrf.mxu0
    %v919 = vadd.f32 0.0, %v918
    %920 = vdwg.mxu0
    %v921 = vadd.f32 %v887, %v919
    %s922 = scalar_lea.vmem %s3, 128
    %v923 = vld [vmem:[%s922] sm:$0xff]
    %v924 = vld [vmem:[%s922 + $0x8] sm:$0xff]
    %v925 = vld [vmem:[%s922 + $0x10] sm:$0xff]
    %v926 = vld [vmem:[%s922 + $0x18] sm:$0xff]
    %v927 = vld [vmem:[%s922 + $0x20] sm:$0xff]
    %v928 = vld [vmem:[%s922 + $0x28] sm:$0xff]
    %v929 = vld [vmem:[%s922 + $0x30] sm:$0xff]
    %v930 = vld [vmem:[%s922 + $0x38] sm:$0xff]
    %v932 = vsel %vm842, %v800, 0
    %934 = vmatpush.msra.mxu0 0.0
    %935 = vmatpush.msra.mxu0 0.0
    %936 = vmatpush.msra.mxu0 0.0
    %937 = vmatpush.msra.mxu0 0.0
    %938 = vmatpush.msra.mxu0 0.0
    %939 = vmatpush.msra.mxu0 0.0
    %940 = vmatpush.msra.mxu0 0.0
    %941 = vmatpush.msra.mxu0 0.0
    %942 = vmatpush.msra.mxu0 %v930
    %943 = vmatpush.msra.mxu0 %v929
    %944 = vmatpush.msra.mxu0 %v928
    %945 = vmatpush.msra.mxu0 %v927
    %946 = vmatpush.msra.mxu0 %v926
    %947 = vmatpush.msra.mxu0 %v925
    %948 = vmatpush.msra.mxu0 %v924
    %949 = vmatpush.msra.mxu0 %v923
    %950 = vmatmul.f32.gmra.mxu0 %v932
    %v951 = vpop.f32.mrf.mxu0
    %v952 = vadd.f32 0.0, %v951
    %953 = vdwg.mxu0
    %v954 = vadd.f32 %v921, %v952
    %s955 = scalar_lea.vmem %s3, 192
    %v956 = vld [vmem:[%s955] sm:$0xff]
    %v957 = vld [vmem:[%s955 + $0x8] sm:$0xff]
    %v958 = vld [vmem:[%s955 + $0x10] sm:$0xff]
    %v959 = vld [vmem:[%s955 + $0x18] sm:$0xff]
    %v960 = vld [vmem:[%s955 + $0x20] sm:$0xff]
    %v961 = vld [vmem:[%s955 + $0x28] sm:$0xff]
    %v962 = vld [vmem:[%s955 + $0x30] sm:$0xff]
    %v963 = vld [vmem:[%s955 + $0x38] sm:$0xff]
    %v965 = vsel %vm842, %v801, 0
    %967 = vmatpush.msra.mxu0 0.0
    %968 = vmatpush.msra.mxu0 0.0
    %969 = vmatpush.msra.mxu0 0.0
    %970 = vmatpush.msra.mxu0 0.0
    %971 = vmatpush.msra.mxu0 0.0
    %972 = vmatpush.msra.mxu0 0.0
    %973 = vmatpush.msra.mxu0 0.0
    %974 = vmatpush.msra.mxu0 0.0
    %975 = vmatpush.msra.mxu0 %v963
    %976 = vmatpush.msra.mxu0 %v962
    %977 = vmatpush.msra.mxu0 %v961
    %978 = vmatpush.msra.mxu0 %v960
    %979 = vmatpush.msra.mxu0 %v959
    %980 = vmatpush.msra.mxu0 %v958
    %981 = vmatpush.msra.mxu0 %v957
    %982 = vmatpush.msra.mxu0 %v956
    %983 = vmatmul.f32.gmra.mxu0 %v965
    %v984 = vpop.f32.mrf.mxu0
    %v985 = vadd.f32 0.0, %v984
    %986 = vdwg.mxu0
    %v987 = vadd.f32 %v954, %v985
    %s988 = scalar_lea.vmem %s3, 256
    %v989 = vld [vmem:[%s988] sm:$0xff]
    %v990 = vld [vmem:[%s988 + $0x8] sm:$0xff]
    %v991 = vld [vmem:[%s988 + $0x10] sm:$0xff]
    %v992 = vld [vmem:[%s988 + $0x18] sm:$0xff]
    %v993 = vld [vmem:[%s988 + $0x20] sm:$0xff]
    %v994 = vld [vmem:[%s988 + $0x28] sm:$0xff]
    %v995 = vld [vmem:[%s988 + $0x30] sm:$0xff]
    %v996 = vld [vmem:[%s988 + $0x38] sm:$0xff]
    %v998 = vsel %vm842, %v802, 0
    %1000 = vmatpush.msra.mxu0 0.0
    %1001 = vmatpush.msra.mxu0 0.0
    %1002 = vmatpush.msra.mxu0 0.0
    %1003 = vmatpush.msra.mxu0 0.0
    %1004 = vmatpush.msra.mxu0 0.0
    %1005 = vmatpush.msra.mxu0 0.0
    %1006 = vmatpush.msra.mxu0 0.0
    %1007 = vmatpush.msra.mxu0 0.0
    %1008 = vmatpush.msra.mxu0 %v996
    %1009 = vmatpush.msra.mxu0 %v995
    %1010 = vmatpush.msra.mxu0 %v994
    %1011 = vmatpush.msra.mxu0 %v993
    %1012 = vmatpush.msra.mxu0 %v992
    %1013 = vmatpush.msra.mxu0 %v991
    %1014 = vmatpush.msra.mxu0 %v990
    %1015 = vmatpush.msra.mxu0 %v989
    %1016 = vmatmul.f32.gmra.mxu0 %v998
    %v1017 = vpop.f32.mrf.mxu0
    %v1018 = vadd.f32 0.0, %v1017
    %1019 = vdwg.mxu0
    %v1020 = vadd.f32 %v987, %v1018
    %s1021 = scalar_lea.vmem %s3, 320
    %v1022 = vld [vmem:[%s1021] sm:$0xff]
    %v1023 = vld [vmem:[%s1021 + $0x8] sm:$0xff]
    %v1024 = vld [vmem:[%s1021 + $0x10] sm:$0xff]
    %v1025 = vld [vmem:[%s1021 + $0x18] sm:$0xff]
    %v1026 = vld [vmem:[%s1021 + $0x20] sm:$0xff]
    %v1027 = vld [vmem:[%s1021 + $0x28] sm:$0xff]
    %v1028 = vld [vmem:[%s1021 + $0x30] sm:$0xff]
    %v1029 = vld [vmem:[%s1021 + $0x38] sm:$0xff]
    %v1031 = vsel %vm842, %v803, 0
    %1033 = vmatpush.msra.mxu0 0.0
    %1034 = vmatpush.msra.mxu0 0.0
    %1035 = vmatpush.msra.mxu0 0.0
    %1036 = vmatpush.msra.mxu0 0.0
    %1037 = vmatpush.msra.mxu0 0.0
    %1038 = vmatpush.msra.mxu0 0.0
    %1039 = vmatpush.msra.mxu0 0.0
    %1040 = vmatpush.msra.mxu0 0.0
    %1041 = vmatpush.msra.mxu0 %v1029
    %1042 = vmatpush.msra.mxu0 %v1028
    %1043 = vmatpush.msra.mxu0 %v1027
    %1044 = vmatpush.msra.mxu0 %v1026
    %1045 = vmatpush.msra.mxu0 %v1025
    %1046 = vmatpush.msra.mxu0 %v1024
    %1047 = vmatpush.msra.mxu0 %v1023
    %1048 = vmatpush.msra.mxu0 %v1022
    %1049 = vmatmul.f32.gmra.mxu0 %v1031
    %v1050 = vpop.f32.mrf.mxu0
    %v1051 = vadd.f32 0.0, %v1050
    %1052 = vdwg.mxu0
    %v1053 = vadd.f32 %v1020, %v1051
    %s1054 = scalar_lea.vmem %s3, 384
    %v1055 = vld [vmem:[%s1054] sm:$0xff]
    %v1056 = vld [vmem:[%s1054 + $0x8] sm:$0xff]
    %v1057 = vld [vmem:[%s1054 + $0x10] sm:$0xff]
    %v1058 = vld [vmem:[%s1054 + $0x18] sm:$0xff]
    %v1059 = vld [vmem:[%s1054 + $0x20] sm:$0xff]
    %v1060 = vld [vmem:[%s1054 + $0x28] sm:$0xff]
    %v1061 = vld [vmem:[%s1054 + $0x30] sm:$0xff]
    %v1062 = vld [vmem:[%s1054 + $0x38] sm:$0xff]
    %v1064 = vsel %vm842, %v804, 0
    %1066 = vmatpush.msra.mxu0 0.0
    %1067 = vmatpush.msra.mxu0 0.0
    %1068 = vmatpush.msra.mxu0 0.0
    %1069 = vmatpush.msra.mxu0 0.0
    %1070 = vmatpush.msra.mxu0 0.0
    %1071 = vmatpush.msra.mxu0 0.0
    %1072 = vmatpush.msra.mxu0 0.0
    %1073 = vmatpush.msra.mxu0 0.0
    %1074 = vmatpush.msra.mxu0 %v1062
    %1075 = vmatpush.msra.mxu0 %v1061
    %1076 = vmatpush.msra.mxu0 %v1060
    %1077 = vmatpush.msra.mxu0 %v1059
    %1078 = vmatpush.msra.mxu0 %v1058
    %1079 = vmatpush.msra.mxu0 %v1057
    %1080 = vmatpush.msra.mxu0 %v1056
    %1081 = vmatpush.msra.mxu0 %v1055
    %1082 = vmatmul.f32.gmra.mxu0 %v1064
    %v1083 = vpop.f32.mrf.mxu0
    %v1084 = vadd.f32 0.0, %v1083
    %1085 = vdwg.mxu0
    %v1086 = vadd.f32 %v1053, %v1084
    %s1087 = scalar_lea.vmem %s3, 448
    %v1088 = vld [vmem:[%s1087] sm:$0xff]
    %v1089 = vld [vmem:[%s1087 + $0x8] sm:$0xff]
    %v1090 = vld [vmem:[%s1087 + $0x10] sm:$0xff]
    %v1091 = vld [vmem:[%s1087 + $0x18] sm:$0xff]
    %v1092 = vld [vmem:[%s1087 + $0x20] sm:$0xff]
    %v1093 = vld [vmem:[%s1087 + $0x28] sm:$0xff]
    %v1094 = vld [vmem:[%s1087 + $0x30] sm:$0xff]
    %v1095 = vld [vmem:[%s1087 + $0x38] sm:$0xff]
    %v1097 = vsel %vm842, %v805, 0
    %1099 = vmatpush.msra.mxu0 0.0
    %1100 = vmatpush.msra.mxu0 0.0
    %1101 = vmatpush.msra.mxu0 0.0
    %1102 = vmatpush.msra.mxu0 0.0
    %1103 = vmatpush.msra.mxu0 0.0
    %1104 = vmatpush.msra.mxu0 0.0
    %1105 = vmatpush.msra.mxu0 0.0
    %1106 = vmatpush.msra.mxu0 0.0
    %1107 = vmatpush.msra.mxu0 %v1095
    %1108 = vmatpush.msra.mxu0 %v1094
    %1109 = vmatpush.msra.mxu0 %v1093
    %1110 = vmatpush.msra.mxu0 %v1092
    %1111 = vmatpush.msra.mxu0 %v1091
    %1112 = vmatpush.msra.mxu0 %v1090
    %1113 = vmatpush.msra.mxu0 %v1089
    %1114 = vmatpush.msra.mxu0 %v1088
    %1115 = vmatmul.f32.gmra.mxu0 %v1097
    %v1116 = vpop.f32.mrf.mxu0
    %v1117 = vadd.f32 0.0, %v1116
    %1118 = vdwg.mxu0
    %v1119 = vadd.f32 %v1086, %v1117
    %v1120 = vtanh.pop %v1119
    %v1121 = vadd.f32 %v1120, 1.0
    %v1122 = vmul.f32 %v1121, 0.5
    %vm1123 = vcmask 80896
    %1124 = vst.msk [vmem:[#allocation2] sm:$0xff] %vm1123, %v1122
    // Predicated region
    $region18: #{tpu_custom_call.1} parent=1 // pred_check
      _
    $region19: #{tpu_custom_call.1} parent=1 // pred_check_branch
      %1126 = sbr.rel (0) target = $region21
    $region20: #{tpu_custom_call.1} parent=1 // pred_region
      %1128 = vsyncadd [#allocation3], 0
      %s1130 = sshll.u32 [#allocation2], 4
      %s1131 = int_to_ptr.vmem [resolvable:$true] %s1130
      %s1132 = sshll.u32 %s4, 4
      %s1133 = int_to_ptr.hbm [resolvable:$true] %s1132
      %1135 = dma.vmem_to_hbm [thread:$0]  %s1131, 128, %s1133, [#allocation3]
    $region21: #{tpu_custom_call.1} parent=1 // pred_fallthru
      _
    // Predicated region
    $region22: #{tpu_custom_call.1} parent=1 // pred_check
      _
    $region23: #{tpu_custom_call.1} parent=1 // pred_check_branch
      %1137 = sbr.rel (0) target = $region25
    $region24: #{tpu_custom_call.1} parent=1 // pred_region
      %1139 = dma.done [#allocation3], 128
    $region25: #{tpu_custom_call.1} parent=1 // pred_fallthru
      _
    %1140 = vsyncpa [#allocation3], 1

</llo_original>
